<compile_context>
chip_gen: v7x
topology: tpu7x:2x2x1
jax: 0.10.0
libtpu: 0.0.40
codegen_flags: <defaults>
</compile_context>

<pallas_src>
import jax
import jax.numpy as jnp
from jax.experimental import pallas as pl
from jax.experimental.pallas import tpu as pltpu

EPS = 1e-5            # PyTorch BatchNorm1d default eps
_SUBLANE = 16         # bf16 sublane packing -> batch padding granule


# ---------------------------------------------------------------------------
# generation detection (VMEM bytes, TensorCores per chip, MXU tile granule)
# ---------------------------------------------------------------------------
def _detect_tpu():
    vmem = 64 << 20          # conservative default (v7x per-TC VMEM)
    num_tc = 1
    granule = 128
    kind = ""
    try:
        kind = jax.devices()[0].device_kind.lower()
    except Exception:
        kind = ""
    try:
        info = pltpu.get_tpu_info()
        v = int(getattr(info, "vmem_capacity_bytes", 0) or 0)
        if v > 0:
            vmem = v
    except Exception:
        if ("v5" in kind) or ("v6" in kind):
            vmem = 128 << 20
    if "v7" in kind:
        num_tc = 2
        granule = 256
        vmem = min(vmem, 64 << 20)       # per-TC VMEM on v7x
    elif "v6" in kind:
        granule = 256
    return vmem, num_tc, granule


_VMEM_BYTES, _NUM_TC, _GRANULE = _detect_tpu()
_FUSED_VMEM_BUDGET = int(_VMEM_BYTES * 0.70)   # fused single-call residency budget
_TILED_VMEM_BUDGET = int(_VMEM_BYTES * 0.60)   # per-step block budget (tiled path)


# ---------------------------------------------------------------------------
# small helpers
# ---------------------------------------------------------------------------
def _round_up(x, m):
    return ((x + m - 1) // m) * m


def _pick_feature_tile(dim_pad, cap, granule):
    """Largest multiple of `granule` <= cap that divides dim_pad."""
    cap = max(granule, min(cap, dim_pad))
    best = granule
    for t in range(granule, cap + 1, granule):
        if dim_pad % t == 0:
            best = t
    return best


def _pick_batch_tile(n_pad, cap):
    """Largest multiple of _SUBLANE <= cap that divides n_pad (n_pad % 16 == 0)."""
    cap = max(_SUBLANE, min(cap, n_pad))
    best = _SUBLANE
    for t in range(_SUBLANE, cap + 1, _SUBLANE):
        if n_pad % t == 0:
            best = t
    return best


def _compiler_params(dimension_semantics=None, vmem_bytes=None):
    kw = {}
    if dimension_semantics is not None:
        kw["dimension_semantics"] = dimension_semantics
    if vmem_bytes is not None and vmem_bytes > (12 << 20):
        limit = int(min(max(int(vmem_bytes * 1.4), 32 << 20),
                        _VMEM_BYTES - (4 << 20), 100 << 20))
        if limit > (16 << 20):
            kw["vmem_limit_bytes"] = limit
    return pltpu.CompilerParams(**kw)


def _fused_vmem_estimate(n_pad, dims_pad):
    est = n_pad * dims_pad[0] * 2                       # x (bf16)
    for k_pad, h_pad in zip(dims_pad[:-1], dims_pad[1:]):
        est += k_pad * h_pad * 2                        # W (bf16, VMEM block or scratch)
        est += 2 * h_pad * 4                            # gamma/beta or bias (f32)
    est += n_pad * dims_pad[-1] * 4                     # output (f32)
    est += 6 * n_pad * max(dims_pad) * 4                # live f32 temporaries (margin)
    return est


# ---------------------------------------------------------------------------
# Kernels
# ---------------------------------------------------------------------------
def _make_fused_kernel(num_hidden, n_valid, n_pad):
    """Whole MLP in one kernel; later-layer weights DMA'd from HBM during compute.

    refs: x, (gamma_i, beta_i)*H, b_out, W0,  W1..W_{H-1},W_out (HBM),
          o_ref,  W-scratch (VMEM)*H, dma_sems
    """
    inv_n = 1.0 / float(n_valid)
    num_later = num_hidden  # W1..W_{H-1} plus W_out

    def kernel(*refs):
        pos = 0
        x_ref = refs[pos]; pos += 1
        gammas, betas = [], []
        for _ in range(num_hidden):
            gammas.append(refs[pos]); betas.append(refs[pos + 1]); pos += 2
        bout_ref = refs[pos]; pos += 1
        w0_ref = refs[pos]; pos += 1
        w_hbm = list(refs[pos:pos + num_later]); pos += num_later
        o_ref = refs[pos]; pos += 1
        w_vmem = list(refs[pos:pos + num_later]); pos += num_later
        sem = refs[pos]

        # Prefetch all later-layer weights; their DMA overlaps earlier compute.
        copies = []
        for i in range(num_later):
            cp = pltpu.make_async_copy(w_hbm[i], w_vmem[i], sem.at[i])
            cp.start()
            copies.append(cp)

        # Padded-row mask hoisted out of the layer loop (computed once).
        if n_pad != n_valid:
            rows = jax.lax.broadcasted_iota(jnp.int32, (n_pad, 1), 0)
            rmask = (rows < n_valid).astype(jnp.float32)
        else:
            rmask = None

        h = x_ref[...]                                   # bf16
        for i in range(num_hidden):
            if i == 0:
                w = w0_ref[...]
            else:
                copies[i - 1].wait()
                w = w_vmem[i - 1][...]
            z = jnp.dot(h, w, preferred_element_type=jnp.float32)
            # exact two-pass batch stats (padded rows of z are exactly zero)
            mean = jnp.sum(z, axis=0, keepdims=True) * inv_n
            c = z - mean
            sq = c * c if rmask is None else (c * c) * rmask
            var = jnp.sum(sq, axis=0, keepdims=True) * inv_n
            scale = gammas[i][...] * jax.lax.rsqrt(var + EPS)
            shift = betas[i][...] - mean * scale
            a = jnp.maximum(z * scale + shift, 0.0)
            if rmask is not None:
                a = a * rmask                            # keep padded rows at zero
            h = a.astype(jnp.bfloat16)

        copies[num_hidden - 1].wait()
        z = jnp.dot(h, w_vmem[num_hidden - 1][...],
                    preferred_element_type=jnp.float32) + bout_ref[...]
        o_ref[...] = z.astype(o_ref.dtype)

    return kernel


def _make_hidden_tiled_kernel(n_valid, n_pad, tk, x_full):
    """Tiled hidden layer: relu(BN(x @ W)). grid = (H tiles, K tiles), K last.

    If x_full, the full activation is resident in VMEM (constant index map) and
    sliced here with pl.ds -> no per-output-tile re-DMA of the activation.
    """
    inv_n = 1.0 / float(n_valid)

    def kernel(x_ref, w_ref, g_ref, b_ref, o_ref, acc_ref):
        k = pl.program_id(1)

        @pl.when(k == 0)
        def _():
            acc_ref[...] = jnp.zeros_like(acc_ref)

        if x_full:
            off = pl.multiple_of(k * tk, tk)
            xblk = x_ref[:, pl.ds(off, tk)]
        else:
            xblk = x_ref[...]
        acc_ref[...] += jnp.dot(xblk, w_ref[...], preferred_element_type=jnp.float32)

        @pl.when(k == pl.num_programs(1) - 1)
        def _():
            z = acc_ref[...]
            mean = jnp.sum(z, axis=0, keepdims=True) * inv_n
            c = z - mean
            if n_pad != n_valid:
                rows = jax.lax.broadcasted_iota(jnp.int32, (n_pad, 1), 0)
                rmask = (rows < n_valid).astype(jnp.float32)
                var = jnp.sum(c * c * rmask, axis=0, keepdims=True) * inv_n
            else:
                rmask = None
                var = jnp.sum(c * c, axis=0, keepdims=True) * inv_n
            scale = g_ref[...] * jax.lax.rsqrt(var + EPS)
            shift = b_ref[...] - mean * scale
            a = jnp.maximum(z * scale + shift, 0.0)
            if rmask is not None:
                a = a * rmask
            o_ref[...] = a.astype(o_ref.dtype)

    return kernel


def _linear_tiled_kernel(x_ref, w_ref, b_ref, o_ref, acc_ref):
    """Final layer: x @ W + b. grid = (M tiles, H tiles, K tiles), K last."""
    k = pl.program_id(2)

    @pl.when(k == 0)
    def _():
        acc_ref[...] = jnp.zeros_like(acc_ref)

    acc_ref[...] += jnp.dot(x_ref[...], w_ref[...],
                            preferred_element_type=jnp.float32)

    @pl.when(k == pl.num_programs(2) - 1)
    def _():
        o_ref[...] = (acc_ref[...] + b_ref[...]).astype(o_ref.dtype)


# ---------------------------------------------------------------------------
# tile selection (VMEM-clamped, generation-aware)
# ---------------------------------------------------------------------------
def _choose_hidden_tiles(n_pad, k_pad, h_pad):
    cap = 512
    th = _pick_feature_tile(h_pad, cap, _GRANULE)
    if _NUM_TC >= 2 and h_pad >= 2 * _GRANULE:
        # guarantee parallel-axis extent >= 2 so both TCs get work
        th = min(th, _pick_feature_tile(h_pad, max(_GRANULE, h_pad // 2), _GRANULE))
    tk = _pick_feature_tile(k_pad, cap, _GRANULE)
    x_full = (2 * n_pad * k_pad * 2) <= _TILED_VMEM_BUDGET // 3

    def bytes_for(tk_, th_, xf):
        xb = (2 * n_pad * k_pad * 2) if xf else (2 * n_pad * tk_ * 2)
        return (xb + 2 * tk_ * th_ * 2 + 4 * th_ * 4 * 2
                + 2 * n_pad * th_ * 2 + n_pad * th_ * 4)

    while bytes_for(tk, th, x_full) > _TILED_VMEM_BUDGET:
        if th > _GRANULE:
            th = _pick_feature_tile(h_pad, th - _GRANULE, _GRANULE)
        elif tk > _GRANULE:
            tk = _pick_feature_tile(k_pad, tk - _GRANULE, _GRANULE)
        elif x_full:
            x_full = False
        else:
            break
    return tk, th, x_full, bytes_for(tk, th, x_full)


def _choose_linear_tiles(n_pad, k_pad, h_pad):
    cap = 512
    th = _pick_feature_tile(h_pad, cap, _GRANULE)
    if _NUM_TC >= 2 and h_pad >= 2 * _GRANULE:
        th = min(th, _pick_feature_tile(h_pad, max(_GRANULE, h_pad // 2), _GRANULE))
    tk = _pick_feature_tile(k_pad, cap, _GRANULE)
    tm = _pick_batch_tile(n_pad, 512)

    def bytes_for(tm_, tk_, th_):
        return (2 * tm_ * tk_ * 2 + 2 * tk_ * th_ * 2 + 2 * th_ * 4 * 2
                + 2 * tm_ * th_ * 4 + tm_ * th_ * 4)

    while bytes_for(tm, tk, th) > _TILED_VMEM_BUDGET:
        if tm > _SUBLANE:
            tm = _pick_batch_tile(n_pad, tm // 2)
        elif th > _GRANULE:
            th = _pick_feature_tile(h_pad, th - _GRANULE, _GRANULE)
        elif tk > _GRANULE:
            tk = _pick_feature_tile(k_pad, tk - _GRANULE, _GRANULE)
        else:
            break
    return tm, tk, th, bytes_for(tm, tk, th)


# ---------------------------------------------------------------------------
# pallas_call wrappers
# ---------------------------------------------------------------------------
def _fused_mlp_call(xp, hidden, final, n_valid, out_pad, vmem_est):
    n_pad = xp.shape[0]
    num_hidden = len(hidden)
    w_list = [w for (w, _, _) in hidden] + [final[0]]     # all weights (padded bf16)
    later = w_list[1:]                                    # DMA'd during compute

    vmem = pl.BlockSpec(memory_space=pltpu.MemorySpace.VMEM)
    anyspace = pl.BlockSpec(memory_space=pl.ANY)

    inputs, specs = [xp], [vmem]
    for (_, g, b) in hidden:
        inputs += [g, b]; specs += [vmem, vmem]
    inputs.append(final[1]); specs.append(vmem)           # final bias
    inputs.append(w_list[0]); specs.append(vmem)          # layer-0 weight (needed first)
    inputs += later; specs += [anyspace] * len(later)     # later weights stay in HBM

    scratch = [pltpu.VMEM(w.shape, w.dtype) for w in later]
    scratch.append(pltpu.SemaphoreType.DMA((len(later),)))

    return pl.pallas_call(
        _make_fused_kernel(num_hidden, n_valid, n_pad),
        out_shape=jax.ShapeDtypeStruct((n_pad, out_pad), jnp.float32),
        in_specs=specs,
        out_specs=vmem,
        scratch_shapes=scratch,
        compiler_params=_compiler_params(vmem_bytes=vmem_est),
    )(*inputs)


def linear_bn_relu_tiled(x, w, gamma, beta, n_valid):
    n_pad, k_pad = x.shape
    h_pad = w.shape[1]
    tk, th, x_full, block_bytes = _choose_hidden_tiles(n_pad, k_pad, h_pad)
    grid = (h_pad // th, k_pad // tk)
    if x_full:
        x_spec = pl.BlockSpec((n_pad, k_pad), lambda j, k: (0, 0))
    else:
        x_spec = pl.BlockSpec((n_pad, tk), lambda j, k: (0, k))
    return pl.pallas_call(
        _make_hidden_tiled_kernel(n_valid, n_pad, tk, x_full),
        out_shape=jax.ShapeDtypeStruct((n_pad, h_pad), jnp.bfloat16),
        grid_spec=pltpu.PrefetchScalarGridSpec(
            num_scalar_prefetch=0,
            grid=grid,
            in_specs=[
                x_spec,                                         # x (batch resident)
                pl.BlockSpec((tk, th), lambda j, k: (k, j)),    # W
                pl.BlockSpec((1, th), lambda j, k: (0, j)),     # gamma
                pl.BlockSpec((1, th), lambda j, k: (0, j)),     # beta
            ],
            out_specs=pl.BlockSpec((n_pad, th), lambda j, k: (0, j)),
            scratch_shapes=[pltpu.VMEM((n_pad, th), jnp.float32)],
        ),
        compiler_params=_compiler_params(("parallel", "arbitrary"), block_bytes),
    )(x, w, gamma, beta)


def linear_tiled(x, w, b):
    n_pad, k_pad = x.shape
    h_pad = w.shape[1]
    tm, tk, th, block_bytes = _choose_linear_tiles(n_pad, k_pad, h_pad)
    grid = (n_pad // tm, h_pad // th, k_pad // tk)
    return pl.pallas_call(
        _linear_tiled_kernel,
        out_shape=jax.ShapeDtypeStruct((n_pad, h_pad), jnp.float32),
        grid_spec=pltpu.PrefetchScalarGridSpec(
            num_scalar_prefetch=0,
            grid=grid,
            in_specs=[
                pl.BlockSpec((tm, tk), lambda m, j, k: (m, k)),
                pl.BlockSpec((tk, th), lambda m, j, k: (k, j)),
                pl.BlockSpec((1, th), lambda m, j, k: (0, j)),
            ],
            out_specs=pl.BlockSpec((tm, th), lambda m, j, k: (m, j)),
            scratch_shapes=[pltpu.VMEM((tm, th), jnp.float32)],
        ),
        compiler_params=_compiler_params(("parallel", "parallel", "arbitrary"),
                                         block_bytes),
    )(x, w, b)


# ---------------------------------------------------------------------------
# MLP construction / forward (mirrors the PyTorch module)
# ---------------------------------------------------------------------------
def init_mlp_params(key, num_layers, input_dim, hidden_dim, output_dim,
                    hidden_layers=None, use_batch_norm=True):
    """nn.Linear default init (uniform +-1/sqrt(fan_in)); weights stored padded bf16."""
    if hidden_layers is not None:
        layers = list(hidden_layers)
        num_layers = len(hidden_layers) + 1
    else:
        layers = [hidden_dim] * (num_layers - 1)

    params = {"identity": False, "is_linear": False, "hidden": [], "final": None}
    if num_layers < 1:
        params["identity"] = True
        params["is_linear"] = True
        params["dims"] = [input_dim, input_dim]
        params["dims_pad"] = [_round_up(input_dim, _GRANULE)] * 2
        return params

    if not use_batch_norm:
        # TODO(synk): use_batch_norm=False (Identity norm; hidden bias then matters)
        # is not wired into the Pallas kernels.
        raise NotImplementedError("use_batch_norm=False path not implemented")

    dims = [input_dim] + layers + [output_dim]
    dims_pad = [_round_up(d, _GRANULE) for d in dims]
    params["dims"], params["dims_pad"] = dims, dims_pad

    def make_linear(k, fan_in, fan_out, fan_in_pad, fan_out_pad, with_bias):
        kw, kb = jax.random.split(k)
        bound = 1.0 / (float(fan_in) ** 0.5)
        w = jax.random.uniform(kw, (fan_in, fan_out), jnp.float32, -bound, bound)
        w_pad = jnp.zeros((fan_in_pad, fan_out_pad), jnp.float32)
        w_pad = w_pad.at[:fan_in, :fan_out].set(w).astype(jnp.bfloat16)
        if not with_bias:
            return w_pad, None
        b = jax.random.uniform(kb, (fan_out,), jnp.float32, -bound, bound)
        b_pad = jnp.zeros((1, fan_out_pad), jnp.float32).at[0, :fan_out].set(b)
        return w_pad, b_pad

    if num_layers == 1:
        params["is_linear"] = True
        key, k = jax.random.split(key)
        params["final"] = make_linear(k, input_dim, output_dim,
                                      dims_pad[0], dims_pad[1], True)
        return params

    # Hidden-layer Linear bias intentionally omitted: with training-mode BN it is
    # exactly cancelled by the mean subtraction (forward-equivalent).
    for i in range(len(layers)):
        key, k = jax.random.split(key)
        w, _ = make_linear(k, dims[i], dims[i + 1], dims_pad[i], dims_pad[i + 1], False)
        gamma = jnp.ones((1, dims_pad[i + 1]), jnp.float32)
        beta = jnp.zeros((1, dims_pad[i + 1]), jnp.float32)
        params["hidden"].append((w, gamma, beta))
    key, k = jax.random.split(key)
    params["final"] = make_linear(k, dims[-2], dims[-1], dims_pad[-2], dims_pad[-1], True)
    return params


def mlp_forward(params, x, force_tiled=False):
    if params["identity"]:
        return x
    dims, dims_pad = params["dims"], params["dims_pad"]
    n = x.shape[0]
    n_pad = _round_up(max(n, _SUBLANE), _SUBLANE)
    xp = jnp.zeros((n_pad, dims_pad[0]), jnp.bfloat16)
    xp = xp.at[:n, : dims[0]].set(x.astype(jnp.bfloat16))

    if params["is_linear"]:
        out = linear_tiled(xp, *params["final"])
        return out[:n, : dims[-1]]

    est = _fused_vmem_estimate(n_pad, dims_pad)
    use_fused = (not force_tiled) and est <= _FUSED_VMEM_BUDGET
    if use_fused and _NUM_TC >= 2:
        # The fused call is grid-less -> single TensorCore.  On 2-TC chips prefer
        # the tiled path (its "parallel" axes shard across cores) once the
        # network is compute-heavy and the parallel extent is >= 2.
        flops = 2.0 * n_pad * sum(a * b for a, b in zip(dims_pad[:-1], dims_pad[1:]))
        if flops >= 1e9 and max(dims_pad[1:]) >= 2 * _GRANULE:
            use_fused = False

    if use_fused:
        out = _fused_mlp_call(xp, params["hidden"], params["final"], n, dims_pad[-1], est)
    else:
        h = xp
        for (w, g, b) in params["hidden"]:
            h = linear_bn_relu_tiled(h, w, g, b, n_valid=n)
        out = linear_tiled(h, *params["final"])
    return out[:n, : dims[-1]]


# ---------------------------------------------------------------------------
# Pure-JAX reference (same math, same bf16 operand rounding, no Pallas)
# ---------------------------------------------------------------------------
def _reference_forward(params, x):
    dims = params["dims"]
    h = x.astype(jnp.float32)
    for i, (w, g, b) in enumerate(params["hidden"]):
        k_t, h_t = dims[i], dims[i + 1]
        w32 = w[:k_t, :h_t].astype(jnp.float32)
        hb = h.astype(jnp.bfloat16).astype(jnp.float32)
        z = hb @ w32
        m = z.mean(axis=0, keepdims=True)
        v = ((z - m) ** 2).mean(axis=0, keepdims=True)
        h = jnp.maximum((z - m) * jax.lax.rsqrt(v + EPS) * g[:, :h_t] + b[:, :h_t], 0.0)
    w, b = params["final"]
    k_t, o_t = dims[-2], dims[-1]
    hb = h.astype(jnp.bfloat16).astype(jnp.float32)
    return hb @ w[:k_t, :o_t].astype(jnp.float32) + b[:, :o_t]


# ---------------------------------------------------------------------------
if __name__ == "__main__":
    key = jax.random.PRNGKey(0)
    k_param, k_x = jax.random.split(key)

    # Small shapes consistent with the module: batch=8, 32 -> 32 -> 32 -> 16.
    num_layers, input_dim, hidden_dim, output_dim = 3, 32, 32, 16
    batch = 8

    params = init_mlp_params(k_param, num_layers, input_dim, hidden_dim, output_dim)
    x = jax.random.normal(k_x, (batch, input_dim), jnp.float32)

    out_fused = mlp_forward(params, x)                     # fused single pallas_call
    out_tiled = mlp_forward(params, x, force_tiled=True)   # per-layer tiled fallback
    jax.block_until_ready((out_fused, out_tiled))

    ref = _reference_forward(params, x)
    assert out_fused.shape == (batch, output_dim)
    assert out_tiled.shape == (batch, output_dim)
    assert jnp.allclose(out_fused, ref, atol=3e-2, rtol=3e-2)
    assert jnp.allclose(out_tiled, ref, atol=3e-2, rtol=3e-2)

    print("KERNEL_OK")
</pallas_src>

<mosaic_0001>
module attributes {stable_mosaic.version = 11 : i64} {
  func.func @kernel(%arg0: memref<16x128xbf16, #tpu.memory_space<vmem>>, %arg1: memref<1x128xf32, #tpu.memory_space<vmem>>, %arg2: memref<1x128xf32, #tpu.memory_space<vmem>>, %arg3: memref<1x128xf32, #tpu.memory_space<vmem>>, %arg4: memref<1x128xf32, #tpu.memory_space<vmem>>, %arg5: memref<1x128xf32, #tpu.memory_space<vmem>>, %arg6: memref<128x128xbf16, #tpu.memory_space<vmem>>, %arg7: memref<128x128xbf16, #tpu.memory_space<any>>, %arg8: memref<128x128xbf16, #tpu.memory_space<any>>, %arg9: memref<16x128xf32, #tpu.memory_space<vmem>>, %arg10: memref<128x128xbf16, #tpu.memory_space<vmem>>, %arg11: memref<128x128xbf16, #tpu.memory_space<vmem>>, %arg12: memref<2x!tpu.dma_semaphore, #tpu.memory_space<semaphore_mem>>) attributes {dimension_semantics = [], scalar_prefetch = 0 : i64, scratch_operands = 3 : i64, tpu.core_type = #tpu.core_type<tc>} {
    %c0_i32 = arith.constant 0 : i32
    %0 = tpu.memref_slice %arg12[%c0_i32] : memref<2x!tpu.dma_semaphore, #tpu.memory_space<semaphore_mem>> -> memref<1x!tpu.dma_semaphore, #tpu.memory_space<semaphore_mem>>
    %1 = tpu.memref_squeeze %0 : memref<1x!tpu.dma_semaphore, #tpu.memory_space<semaphore_mem>> -> memref<!tpu.dma_semaphore, #tpu.memory_space<semaphore_mem>>
    tpu.enqueue_dma source(%arg7 : memref<128x128xbf16, #tpu.memory_space<any>>) target(%arg10 : memref<128x128xbf16, #tpu.memory_space<vmem>>) target_semaphore(%1 : memref<!tpu.dma_semaphore, #tpu.memory_space<semaphore_mem>>)
    %c1_i32 = arith.constant 1 : i32
    %2 = tpu.memref_slice %arg12[%c1_i32] : memref<2x!tpu.dma_semaphore, #tpu.memory_space<semaphore_mem>> -> memref<1x!tpu.dma_semaphore, #tpu.memory_space<semaphore_mem>>
    %3 = tpu.memref_squeeze %2 : memref<1x!tpu.dma_semaphore, #tpu.memory_space<semaphore_mem>> -> memref<!tpu.dma_semaphore, #tpu.memory_space<semaphore_mem>>
    tpu.enqueue_dma source(%arg8 : memref<128x128xbf16, #tpu.memory_space<any>>) target(%arg11 : memref<128x128xbf16, #tpu.memory_space<vmem>>) target_semaphore(%3 : memref<!tpu.dma_semaphore, #tpu.memory_space<semaphore_mem>>)
    %4 = tpu.iota {dimensions = array<i32: 0>} : vector<16x1xi32>
    %c8_i32 = arith.constant 8 : i32
    %5 = vector.broadcast %c8_i32 : i32 to vector<16x1xi32>
    %6 = arith.cmpi slt, %4, %5 : vector<16x1xi32>
    %7 = arith.extui %6 : vector<16x1xi1> to vector<16x1xi32>
    %8 = arith.sitofp %7 : vector<16x1xi32> to vector<16x1xf32>
    %c0 = arith.constant 0 : index
    %c0_0 = arith.constant 0 : index
    %9 = vector.load %arg0[%c0, %c0_0] : memref<16x128xbf16, #tpu.memory_space<vmem>>, vector<16x128xbf16>
    %c0_1 = arith.constant 0 : index
    %c0_2 = arith.constant 0 : index
    %10 = vector.load %arg6[%c0_1, %c0_2] : memref<128x128xbf16, #tpu.memory_space<vmem>>, vector<128x128xbf16>
    %cst = arith.constant dense<0.000000e+00> : vector<16x128xf32>
    %11 = tpu.matmul %9, %10, %cst {dimension_numbers = #tpu.dot_dimension_numbers<[1], [0], [0], [1], [0, 0, 1, 1], [], []>} : vector<16x128xbf16>, vector<128x128xbf16>, vector<16x128xf32> -> vector<16x128xf32>
    %cst_3 = arith.constant dense<0.000000e+00> : vector<128xf32>
    %12 = vector.multi_reduction <add>, %11, %cst_3 [0] : vector<16x128xf32> to vector<128xf32>
    %13 = vector.shape_cast %12 : vector<128xf32> to vector<1x128xf32>
    %cst_4 = arith.constant 1.250000e-01 : f32
    %14 = vector.broadcast %cst_4 : f32 to vector<1x128xf32>
    %15 = arith.mulf %13, %14 : vector<1x128xf32>
    %16 = vector.broadcast %15 : vector<1x128xf32> to vector<16x128xf32>
    %17 = arith.subf %11, %16 : vector<16x128xf32>
    %18 = arith.mulf %17, %17 : vector<16x128xf32>
    %19 = vector.broadcast %8 : vector<16x1xf32> to vector<16x128xf32>
    %20 = arith.mulf %18, %19 : vector<16x128xf32>
    %cst_5 = arith.constant dense<0.000000e+00> : vector<128xf32>
    %21 = vector.multi_reduction <add>, %20, %cst_5 [0] : vector<16x128xf32> to vector<128xf32>
    %22 = vector.shape_cast %21 : vector<128xf32> to vector<1x128xf32>
    %cst_6 = arith.constant 1.250000e-01 : f32
    %23 = vector.broadcast %cst_6 : f32 to vector<1x128xf32>
    %24 = arith.mulf %22, %23 : vector<1x128xf32>
    %c0_7 = arith.constant 0 : index
    %c0_8 = arith.constant 0 : index
    %25 = vector.load %arg1[%c0_7, %c0_8] : memref<1x128xf32, #tpu.memory_space<vmem>>, vector<1x128xf32>
    %cst_9 = arith.constant 9.99999974E-6 : f32
    %26 = vector.broadcast %cst_9 : f32 to vector<1x128xf32>
    %27 = arith.addf %24, %26 : vector<1x128xf32>
    %28 = math.rsqrt %27 : vector<1x128xf32>
    %29 = arith.mulf %25, %28 : vector<1x128xf32>
    %c0_10 = arith.constant 0 : index
    %c0_11 = arith.constant 0 : index
    %30 = vector.load %arg2[%c0_10, %c0_11] : memref<1x128xf32, #tpu.memory_space<vmem>>, vector<1x128xf32>
    %31 = arith.mulf %15, %29 : vector<1x128xf32>
    %32 = arith.subf %30, %31 : vector<1x128xf32>
    %33 = vector.broadcast %29 : vector<1x128xf32> to vector<16x128xf32>
    %34 = arith.mulf %11, %33 : vector<16x128xf32>
    %35 = vector.broadcast %32 : vector<1x128xf32> to vector<16x128xf32>
    %36 = arith.addf %34, %35 : vector<16x128xf32>
    %cst_12 = arith.constant 0.000000e+00 : f32
    %37 = vector.broadcast %cst_12 : f32 to vector<16x128xf32>
    %38 = arith.maximumf %36, %37 : vector<16x128xf32>
    %39 = vector.broadcast %8 : vector<16x1xf32> to vector<16x128xf32>
    %40 = arith.mulf %38, %39 : vector<16x128xf32>
    %41 = arith.truncf %40 : vector<16x128xf32> to vector<16x128xbf16>
    %c0_i32_13 = arith.constant 0 : i32
    %42 = tpu.memref_slice %arg12[%c0_i32_13] : memref<2x!tpu.dma_semaphore, #tpu.memory_space<semaphore_mem>> -> memref<1x!tpu.dma_semaphore, #tpu.memory_space<semaphore_mem>>
    %43 = tpu.memref_squeeze %42 : memref<1x!tpu.dma_semaphore, #tpu.memory_space<semaphore_mem>> -> memref<!tpu.dma_semaphore, #tpu.memory_space<semaphore_mem>>
    tpu.wait_dma2 semaphore(%43 : memref<!tpu.dma_semaphore, #tpu.memory_space<semaphore_mem>>) src(%arg7 : memref<128x128xbf16, #tpu.memory_space<any>>) dst(%arg10 : memref<128x128xbf16, #tpu.memory_space<vmem>>)
    %c0_14 = arith.constant 0 : index
    %c0_15 = arith.constant 0 : index
    %44 = vector.load %arg10[%c0_14, %c0_15] : memref<128x128xbf16, #tpu.memory_space<vmem>>, vector<128x128xbf16>
    %cst_16 = arith.constant dense<0.000000e+00> : vector<16x128xf32>
    %45 = tpu.matmul %41, %44, %cst_16 {dimension_numbers = #tpu.dot_dimension_numbers<[1], [0], [0], [1], [0, 0, 1, 1], [], []>} : vector<16x128xbf16>, vector<128x128xbf16>, vector<16x128xf32> -> vector<16x128xf32>
    %cst_17 = arith.constant dense<0.000000e+00> : vector<128xf32>
    %46 = vector.multi_reduction <add>, %45, %cst_17 [0] : vector<16x128xf32> to vector<128xf32>
    %47 = vector.shape_cast %46 : vector<128xf32> to vector<1x128xf32>
    %cst_18 = arith.constant 1.250000e-01 : f32
    %48 = vector.broadcast %cst_18 : f32 to vector<1x128xf32>
    %49 = arith.mulf %47, %48 : vector<1x128xf32>
    %50 = vector.broadcast %49 : vector<1x128xf32> to vector<16x128xf32>
    %51 = arith.subf %45, %50 : vector<16x128xf32>
    %52 = arith.mulf %51, %51 : vector<16x128xf32>
    %53 = vector.broadcast %8 : vector<16x1xf32> to vector<16x128xf32>
    %54 = arith.mulf %52, %53 : vector<16x128xf32>
    %cst_19 = arith.constant dense<0.000000e+00> : vector<128xf32>
    %55 = vector.multi_reduction <add>, %54, %cst_19 [0] : vector<16x128xf32> to vector<128xf32>
    %56 = vector.shape_cast %55 : vector<128xf32> to vector<1x128xf32>
    %cst_20 = arith.constant 1.250000e-01 : f32
    %57 = vector.broadcast %cst_20 : f32 to vector<1x128xf32>
    %58 = arith.mulf %56, %57 : vector<1x128xf32>
    %c0_21 = arith.constant 0 : index
    %c0_22 = arith.constant 0 : index
    %59 = vector.load %arg3[%c0_21, %c0_22] : memref<1x128xf32, #tpu.memory_space<vmem>>, vector<1x128xf32>
    %cst_23 = arith.constant 9.99999974E-6 : f32
    %60 = vector.broadcast %cst_23 : f32 to vector<1x128xf32>
    %61 = arith.addf %58, %60 : vector<1x128xf32>
    %62 = math.rsqrt %61 : vector<1x128xf32>
    %63 = arith.mulf %59, %62 : vector<1x128xf32>
    %c0_24 = arith.constant 0 : index
    %c0_25 = arith.constant 0 : index
    %64 = vector.load %arg4[%c0_24, %c0_25] : memref<1x128xf32, #tpu.memory_space<vmem>>, vector<1x128xf32>
    %65 = arith.mulf %49, %63 : vector<1x128xf32>
    %66 = arith.subf %64, %65 : vector<1x128xf32>
    %67 = vector.broadcast %63 : vector<1x128xf32> to vector<16x128xf32>
    %68 = arith.mulf %45, %67 : vector<16x128xf32>
    %69 = vector.broadcast %66 : vector<1x128xf32> to vector<16x128xf32>
    %70 = arith.addf %68, %69 : vector<16x128xf32>
    %cst_26 = arith.constant 0.000000e+00 : f32
    %71 = vector.broadcast %cst_26 : f32 to vector<16x128xf32>
    %72 = arith.maximumf %70, %71 : vector<16x128xf32>
    %73 = vector.broadcast %8 : vector<16x1xf32> to vector<16x128xf32>
    %74 = arith.mulf %72, %73 : vector<16x128xf32>
    %75 = arith.truncf %74 : vector<16x128xf32> to vector<16x128xbf16>
    %c1_i32_27 = arith.constant 1 : i32
    %76 = tpu.memref_slice %arg12[%c1_i32_27] : memref<2x!tpu.dma_semaphore, #tpu.memory_space<semaphore_mem>> -> memref<1x!tpu.dma_semaphore, #tpu.memory_space<semaphore_mem>>
    %77 = tpu.memref_squeeze %76 : memref<1x!tpu.dma_semaphore, #tpu.memory_space<semaphore_mem>> -> memref<!tpu.dma_semaphore, #tpu.memory_space<semaphore_mem>>
    tpu.wait_dma2 semaphore(%77 : memref<!tpu.dma_semaphore, #tpu.memory_space<semaphore_mem>>) src(%arg8 : memref<128x128xbf16, #tpu.memory_space<any>>) dst(%arg11 : memref<128x128xbf16, #tpu.memory_space<vmem>>)
    %c0_28 = arith.constant 0 : index
    %c0_29 = arith.constant 0 : index
    %78 = vector.load %arg11[%c0_28, %c0_29] : memref<128x128xbf16, #tpu.memory_space<vmem>>, vector<128x128xbf16>
    %cst_30 = arith.constant dense<0.000000e+00> : vector<16x128xf32>
    %79 = tpu.matmul %75, %78, %cst_30 {dimension_numbers = #tpu.dot_dimension_numbers<[1], [0], [0], [1], [0, 0, 1, 1], [], []>} : vector<16x128xbf16>, vector<128x128xbf16>, vector<16x128xf32> -> vector<16x128xf32>
    %c0_31 = arith.constant 0 : index
    %c0_32 = arith.constant 0 : index
    %80 = vector.load %arg5[%c0_31, %c0_32] : memref<1x128xf32, #tpu.memory_space<vmem>>, vector<1x128xf32>
    %81 = vector.broadcast %80 : vector<1x128xf32> to vector<16x128xf32>
    %82 = arith.addf %79, %81 : vector<16x128xf32>
    %c0_33 = arith.constant 0 : index
    %c0_34 = arith.constant 0 : index
    %83 = vector.load %arg9[%c0_33, %c0_34] : memref<16x128xf32, #tpu.memory_space<vmem>>, vector<16x128xf32>
    tpu.vector_store %arg9[%c0_33, %c0_34], %82 {strides = array<i32>} : memref<16x128xf32, #tpu.memory_space<vmem>>, vector<16x128xf32>,
    return
  }
}

</mosaic_0001>

<llo_original>
// kernel: tpu_custom_call.1
$region0: #{tpu_custom_call.1}
  #allocation0 [shape = 'u32[]', space=smem, size = 0x4, offset = 0x4, fixed_abs, tag = 'smem constant byte address 0x4 - core index']
  #allocation1 [shape = 'u32[144,128]{1,0:T(1,128)}', space=vmem, size = 0x12000, scoped, tag = 'internal scratch']
  #allocation2 [shape = 'bf16[128,128]{1,0:T(16,128)(2,1)}', space=vmem, size = 0x8000, scoped, tag = 'scratch operand']
  #allocation3 [shape = 'bf16[128,128]{1,0:T(16,128)(2,1)}', space=vmem, size = 0x8000, scoped, tag = 'scratch operand']
  #allocation4 [shape = 's32[2]{0}', space=sflag, size = 0x8, scoped, tag = 'scratch operand']
  #allocation11 [shape = 's32[]', space=sflag, size = 0x4, offset = 0, fixed_abs, tag = 'sflag constant byte address 0x0 - dummy sync flag']
  #allocation12 [shape = 's32[]', space=sflag, size = 0x4, offset = 0, fixed_abs, tag = 'sflag constant byte address 0x0 - dummy sync flag']
  #allocation13 [shape = 'u32[]', space=smem, size = 0x4, offset = 0x44, fixed_abs, tag = 'smem constant byte address 0x44 - assertion arg 0']
  #allocation14 [shape = 'u32[]', space=smem, size = 0x4, offset = 0x48, fixed_abs, tag = 'smem constant byte address 0x48 - assertion arg 1']
  #allocation15 [shape = 's32[]', space=sflag, size = 0x4, offset = 0, fixed_abs, tag = 'sflag constant byte address 0x0 - dummy sync flag']
  #allocation16 [shape = 's32[]', space=sflag, size = 0x4, offset = 0, fixed_abs, tag = 'sflag constant byte address 0x0 - dummy sync flag']
  %s0 = inlined_call_operand.hbm [shape: bf16[16,128], index: 0, kind: input, shape index: {}]
  %s1 = inlined_call_operand.vmem [shape: f32[1,128], index: 1, kind: input, shape index: {}]
  %s2 = inlined_call_operand.vmem [shape: f32[1,128], index: 2, kind: input, shape index: {}]
  %s3 = inlined_call_operand.vmem [shape: f32[1,128], index: 3, kind: input, shape index: {}]
  %s4 = inlined_call_operand.vmem [shape: f32[1,128], index: 4, kind: input, shape index: {}]
  %s5 = inlined_call_operand.vmem [shape: f32[1,128], index: 5, kind: input, shape index: {}]
  %s6 = inlined_call_operand.hbm [shape: bf16[128,128], index: 6, kind: input, shape index: {}]
  %s7 = inlined_call_operand.hbm [shape: bf16[128,128], index: 7, kind: input, shape index: {}]
  %s8 = inlined_call_operand.hbm [shape: bf16[128,128], index: 8, kind: input, shape index: {}]
  %s9 = inlined_call_operand.hbm [shape: f32[16,128], index: 9, kind: output, shape index: {}]
  %s10 = sld [smem:[#allocation0]]
  $region54: #{tpu_custom_call.1} parent=0
    _
  %s12 = ssub.s32 1, %s10
  %s13 = scalar_select 0, %s12, %s10
  $region1: #{tpu_custom_call.1} parent=0
    #allocation5 [shape = 'u8[4096]{0}', space=vmem, size = 0x1000, scoped, tag = 'input window, operand 0, single buffered']
    #allocation6 [shape = 's32[1]{0}', space=sflag, size = 0x4, scoped, tag = 'scoped memory for tpu_custom_call.1']
    #allocation7 [shape = 's32[1]{0}', space=sflag, size = 0x4, scoped, tag = 'scoped memory for tpu_custom_call.1']
    #allocation8 [shape = 'u8[32768]{0}', space=vmem, size = 0x8000, scoped, tag = 'input window, operand 6, single buffered']
    #allocation9 [shape = 's32[1]{0}', space=sflag, size = 0x4, scoped, tag = 'scoped memory for tpu_custom_call.1']
    #allocation10 [shape = 'u8[8192]{0}', space=vmem, size = 0x2000, scoped, tag = 'output window, operand 0, single buffered']
    %14 = vsyncpa [#allocation6], 0
    %15 = vsyncpa [#allocation9], 0
    %16 = vsyncpa [#allocation7], 0
    // Predicated region
    $region2: #{tpu_custom_call.1} parent=1 // pred_check
      _
    $region3: #{tpu_custom_call.1} parent=1 // pred_check_branch
      %18 = sbr.rel (0) target = $region5
    $region4: #{tpu_custom_call.1} parent=1 // pred_region
      %s20 = ssub.s32 128, 128
      %21 = vsyncadd [#allocation6], %s20
      %s22 = sshll.u32 [#allocation5], 4
      %s23 = int_to_ptr.vmem [resolvable:$true] %s22
      %28 = dma.hbm_to_vmem [thread:$0]  %s0, 128, %s23, [#allocation6], 64, 64, 4
    $region5: #{tpu_custom_call.1} parent=1 // pred_fallthru
      _
    // Predicated region
    $region6: #{tpu_custom_call.1} parent=1 // pred_check
      _
    $region7: #{tpu_custom_call.1} parent=1 // pred_check_branch
      %30 = sbr.rel (0) target = $region9
    $region8: #{tpu_custom_call.1} parent=1 // pred_region
      _
    $region9: #{tpu_custom_call.1} parent=1 // pred_fallthru
      _
    // Predicated region
    $region10: #{tpu_custom_call.1} parent=1 // pred_check
      _
    $region11: #{tpu_custom_call.1} parent=1 // pred_check_branch
      %32 = sbr.rel (0) target = $region13
    $region12: #{tpu_custom_call.1} parent=1 // pred_region
      _
    $region13: #{tpu_custom_call.1} parent=1 // pred_fallthru
      _
    // Predicated region
    $region14: #{tpu_custom_call.1} parent=1 // pred_check
      _
    $region15: #{tpu_custom_call.1} parent=1 // pred_check_branch
      %34 = sbr.rel (0) target = $region17
    $region16: #{tpu_custom_call.1} parent=1 // pred_region
      _
    $region17: #{tpu_custom_call.1} parent=1 // pred_fallthru
      _
    // Predicated region
    $region18: #{tpu_custom_call.1} parent=1 // pred_check
      _
    $region19: #{tpu_custom_call.1} parent=1 // pred_check_branch
      %36 = sbr.rel (0) target = $region21
    $region20: #{tpu_custom_call.1} parent=1 // pred_region
      _
    $region21: #{tpu_custom_call.1} parent=1 // pred_fallthru
      _
    // Predicated region
    $region22: #{tpu_custom_call.1} parent=1 // pred_check
      _
    $region23: #{tpu_custom_call.1} parent=1 // pred_check_branch
      %38 = sbr.rel (0) target = $region25
    $region24: #{tpu_custom_call.1} parent=1 // pred_region
      _
    $region25: #{tpu_custom_call.1} parent=1 // pred_fallthru
      _
    // Predicated region
    $region26: #{tpu_custom_call.1} parent=1 // pred_check
      _
    $region27: #{tpu_custom_call.1} parent=1 // pred_check_branch
      %40 = sbr.rel (0) target = $region29
    $region28: #{tpu_custom_call.1} parent=1 // pred_region
      %s42 = ssub.s32 1024, 1024
      %43 = vsyncadd [#allocation9], %s42
      %s44 = sshll.u32 [#allocation8], 4
      %s45 = int_to_ptr.vmem [resolvable:$true] %s44
      %50 = dma.hbm_to_vmem [thread:$0]  %s6, 1024, %s45, [#allocation9], 64, 64, 4
    $region29: #{tpu_custom_call.1} parent=1 // pred_fallthru
      _
    // Predicated region
    $region30: #{tpu_custom_call.1} parent=1 // pred_check
      _
    $region31: #{tpu_custom_call.1} parent=1 // pred_check_branch
      %52 = sbr.rel (0) target = $region33
    $region32: #{tpu_custom_call.1} parent=1 // pred_region
      %53 = dma.done [#allocation6], 128
    $region33: #{tpu_custom_call.1} parent=1 // pred_fallthru
      _
    // Predicated region
    $region34: #{tpu_custom_call.1} parent=1 // pred_check
      _
    $region35: #{tpu_custom_call.1} parent=1 // pred_check_branch
      %55 = sbr.rel (0) target = $region37
    $region36: #{tpu_custom_call.1} parent=1 // pred_region
      %56 = dma.done [#allocation9], 1024
    $region37: #{tpu_custom_call.1} parent=1 // pred_fallthru
      _
    // Predicated region
    $region38: #{tpu_custom_call.1} parent=1 // pred_check
      _
    $region39: #{tpu_custom_call.1} parent=1 // pred_check_branch
      %59 = sbr.rel target = $region41
    $region40: #{tpu_custom_call.1} parent=1 // pred_region
      %60 = sst [smem:[#allocation13]] [#allocation12]
      %61 = sst [smem:[#allocation14]] [#allocation11]
    $region41: #{tpu_custom_call.1} parent=1 // pred_fallthru
      _
    %63 = shalt.err (0)
    %s65 = sshll.u32 [#allocation2], 4
    %s66 = int_to_ptr.vmem [resolvable:$true] %s65
    %68 = dma.hbm_to_vmem [thread:$0]  %s7, 1024, %s66, [#allocation4]
    %s69 = scalar_lea.sflag [#allocation4], 1
    // Predicated region
    $region42: #{tpu_custom_call.1} parent=1 // pred_check
      _
    $region43: #{tpu_custom_call.1} parent=1 // pred_check_branch
      %71 = sbr.rel target = $region45
    $region44: #{tpu_custom_call.1} parent=1 // pred_region
      %72 = sst [smem:[#allocation13]] [#allocation16]
      %73 = sst [smem:[#allocation14]] [#allocation15]
    $region45: #{tpu_custom_call.1} parent=1 // pred_fallthru
      _
    %75 = shalt.err (0)
    %s77 = sshll.u32 [#allocation3], 4
    %s78 = int_to_ptr.vmem [resolvable:$true] %s77
    %80 = dma.hbm_to_vmem [thread:$0]  %s8, 1024, %s78, %s69
    %v81 = vlaneseq
    %v82 = vshrl.u32 %v81, 7
    %v83 = vadd.s32 %v82, 8
    %vm84 = vcmp.lt.s32.totalorder %v82, 8
    %vm85 = vcmp.lt.s32.totalorder %v83, 8
    %v86 = vsel %vm84, 1, 0
    %v87 = vsel %vm85, 1, 0
    %v88 = vcvt.s32.f32 %v86
    %v89 = vcvt.s32.f32 %v87
    %v90 = vld [vmem:[#allocation5] sm:$0xf]
    %v91 = vld [vmem:[#allocation5 + $0x4] sm:$0xf]
    %v92 = vld [vmem:[#allocation8] sm:$0xf]
    %v93 = vld [vmem:[#allocation8 + $0x4] sm:$0xf]
    %v94 = vld [vmem:[#allocation8 + $0x8] sm:$0xf]
    %v95 = vld [vmem:[#allocation8 + $0xc] sm:$0xf]
    %v96 = vld [vmem:[#allocation8 + $0x10] sm:$0xf]
    %v97 = vld [vmem:[#allocation8 + $0x14] sm:$0xf]
    %v98 = vld [vmem:[#allocation8 + $0x18] sm:$0xf]
    %v99 = vld [vmem:[#allocation8 + $0x1c] sm:$0xf]
    %v100 = vld [vmem:[#allocation8 + $0x20] sm:$0xf]
    %v101 = vld [vmem:[#allocation8 + $0x24] sm:$0xf]
    %v102 = vld [vmem:[#allocation8 + $0x28] sm:$0xf]
    %v103 = vld [vmem:[#allocation8 + $0x2c] sm:$0xf]
    %v104 = vld [vmem:[#allocation8 + $0x30] sm:$0xf]
    %v105 = vld [vmem:[#allocation8 + $0x34] sm:$0xf]
    %v106 = vld [vmem:[#allocation8 + $0x38] sm:$0xf]
    %v107 = vld [vmem:[#allocation8 + $0x3c] sm:$0xf]
    %v110 = vunpack.c.l.b16 %v90
    %v111 = vunpack.c.l.b16 %v91
    %v112 = vpack.c.b16 %v111, %v110
    %v130 = vunpack.c.l.b16 %v92
    %v131 = vunpack.c.l.b16 %v93
    %v132 = vunpack.c.l.b16 %v94
    %v133 = vunpack.c.l.b16 %v95
    %v134 = vunpack.c.l.b16 %v96
    %v135 = vunpack.c.l.b16 %v97
    %v136 = vunpack.c.l.b16 %v98
    %v137 = vunpack.c.l.b16 %v99
    %v138 = vunpack.c.l.b16 %v100
    %v139 = vunpack.c.l.b16 %v101
    %v140 = vunpack.c.l.b16 %v102
    %v141 = vunpack.c.l.b16 %v103
    %v142 = vunpack.c.l.b16 %v104
    %v143 = vunpack.c.l.b16 %v105
    %v144 = vunpack.c.l.b16 %v106
    %v145 = vunpack.c.l.b16 %v107
    %v146 = vpack.c.b16 %v131, %v130
    %v147 = vpack.c.b16 %v133, %v132
    %v148 = vpack.c.b16 %v135, %v134
    %v149 = vpack.c.b16 %v137, %v136
    %v150 = vpack.c.b16 %v139, %v138
    %v151 = vpack.c.b16 %v141, %v140
    %v152 = vpack.c.b16 %v143, %v142
    %v153 = vpack.c.b16 %v145, %v144
    %162 = vmatprep.subr.bf16.mxu0 0
    %163 = vmatpush1.bf16.msra.mxu0 %v146
    %164 = vmatprep.subr.bf16.mxu0 0
    %165 = vmatpush1.bf16.msra.mxu0 %v147
    %166 = vmatprep.subr.bf16.mxu0 0
    %167 = vmatpush1.bf16.msra.mxu0 %v148
    %168 = vmatprep.subr.bf16.mxu0 0
    %169 = vmatpush1.bf16.msra.mxu0 %v149
    %170 = vmatprep.subr.bf16.mxu0 0
    %171 = vmatpush1.bf16.msra.mxu0 %v150
    %172 = vmatprep.subr.bf16.mxu0 0
    %173 = vmatpush1.bf16.msra.mxu0 %v151
    %174 = vmatprep.subr.bf16.mxu0 0
    %175 = vmatpush1.bf16.msra.mxu0 %v152
    %176 = vmatprep.subr.bf16.mxu0 0
    %177 = vmatpush1.bf16.msra.mxu0 %v153
    %178 = vmatprep.subr.bf16.mxu0 0
    %179 = vmatpush1.bf16.msra.mxu0 0
    %180 = vmatprep.subr.bf16.mxu0 0
    %181 = vmatpush1.bf16.msra.mxu0 0
    %182 = vmatprep.subr.bf16.mxu0 0
    %183 = vmatpush1.bf16.msra.mxu0 0
    %184 = vmatprep.subr.bf16.mxu0 0
    %185 = vmatpush1.bf16.msra.mxu0 0
    %186 = vmatprep.subr.bf16.mxu0 0
    %187 = vmatpush1.bf16.msra.mxu0 0
    %188 = vmatprep.subr.bf16.mxu0 0
    %189 = vmatpush1.bf16.msra.mxu0 0
    %190 = vmatprep.subr.bf16.mxu0 0
    %191 = vmatpush1.bf16.msra.mxu0 0
    %192 = vmatprep.subr.bf16.mxu0 0
    %193 = vmatpush1.bf16.msra.mxu0 0
    %194 = vmatprep.mubr.bf16.mxu0 0
    %195 = vmatmul.mubr.bf16.gmra.mrb[0].mxu0 %v112
    %v196 = vpop.f32.mrb[0].mxu0
    %v197 = vadd.f32 0.0, %v196
    %v198 = vpop.f32.mrb[0].mxu0
    %v199 = vpop.f32.mrb[0].mxu0
    %v200 = vadd.f32 0.0, %v199
    %v201 = vpop.f32.mrb[0].mxu0
    %202 = vdwg.mxu0
    %v203 = vadd.f32 %v197, %v200
    %v204 = vrot.slane %v203, 4
    %v205 = vadd.f32 %v203, %v204
    %v206 = vrot.slane %v205, 2
    %v207 = vadd.f32 %v205, %v206
    %v208 = vrot.slane %v207, 1
    %v209 = vadd.f32 %v207, %v208
    %v210 = vmul.f32 %v209, 0.125
    %v211 = vsub.f32 %v197, %v210
    %v212 = vsub.f32 %v200, %v210
    %v213 = vmul.f32 %v211, %v211
    %v214 = vmul.f32 %v212, %v212
    %v215 = vmul.f32 %v213, %v88
    %v216 = vmul.f32 %v214, %v89
    %v217 = vadd.f32 %v215, %v216
    %v218 = vrot.slane %v217, 4
    %v219 = vadd.f32 %v217, %v218
    %v220 = vrot.slane %v219, 2
    %v221 = vadd.f32 %v219, %v220
    %v222 = vrot.slane %v221, 1
    %v223 = vadd.f32 %v221, %v222
    %v224 = vmul.f32 %v223, 0.125
    %v225 = vld [vmem:[%s1] sm:$0x1]
    %v226 = vadd.f32 %v224, 1e-05
    %v227 = vrsqrt.pop %v226
    %v228 = vmul.f32 %v225, %v227
    %v229 = vld [vmem:[%s2] sm:$0x1]
    %v230 = vmul.f32 %v210, %v228
    %v231 = vsub.f32 %v229, %v230
    %v233 = vlaneseq
    %v234 = vshrl.u32 %v233, 7
    %v235 = vsub.s32 0, %v234
    %v236 = vrot.slane %v228, %v235
    %v238 = vmul.f32 %v197, %v236
    %v239 = vmul.f32 %v200, %v236
    %v241 = vlaneseq
    %v242 = vshrl.u32 %v241, 7
    %v243 = vsub.s32 0, %v242
    %v244 = vrot.slane %v231, %v243
    %v246 = vadd.f32 %v238, %v244
    %v247 = vadd.f32 %v239, %v244
    %v248 = vmax.f32 %v246, 0.0
    %v249 = vmax.f32 %v247, 0.0
    %v250 = vmul.f32 %v248, %v88
    %v251 = vmul.f32 %v249, %v89
    %v252 = vpack.c.bf16 %v251, %v250
    %s253 = smul.u32 4, 16
    %s254 = smul.u32 %s253, 1
    %s255 = sshll.u32 %s254, 4
    %256 = dma.done [#allocation4], %s255
    %v257 = vld [vmem:[#allocation2] sm:$0xff]
    %v258 = vld [vmem:[#allocation2 + $0x8] sm:$0xff]
    %v259 = vld [vmem:[#allocation2 + $0x10] sm:$0xff]
    %v260 = vld [vmem:[#allocation2 + $0x18] sm:$0xff]
    %v261 = vld [vmem:[#allocation2 + $0x20] sm:$0xff]
    %v262 = vld [vmem:[#allocation2 + $0x28] sm:$0xff]
    %v263 = vld [vmem:[#allocation2 + $0x30] sm:$0xff]
    %v264 = vld [vmem:[#allocation2 + $0x38] sm:$0xff]
    %265 = vmatprep.subr.bf16.mxu0 0
    %266 = vmatpush1.bf16.msra.mxu0 %v257
    %267 = vmatprep.subr.bf16.mxu0 0
    %268 = vmatpush1.bf16.msra.mxu0 %v258
    %269 = vmatprep.subr.bf16.mxu0 0
    %270 = vmatpush1.bf16.msra.mxu0 %v259
    %271 = vmatprep.subr.bf16.mxu0 0
    %272 = vmatpush1.bf16.msra.mxu0 %v260
    %273 = vmatprep.subr.bf16.mxu0 0
    %274 = vmatpush1.bf16.msra.mxu0 %v261
    %275 = vmatprep.subr.bf16.mxu0 0
    %276 = vmatpush1.bf16.msra.mxu0 %v262
    %277 = vmatprep.subr.bf16.mxu0 0
    %278 = vmatpush1.bf16.msra.mxu0 %v263
    %279 = vmatprep.subr.bf16.mxu0 0
    %280 = vmatpush1.bf16.msra.mxu0 %v264
    %281 = vmatprep.subr.bf16.mxu0 0
    %282 = vmatpush1.bf16.msra.mxu0 0
    %283 = vmatprep.subr.bf16.mxu0 0
    %284 = vmatpush1.bf16.msra.mxu0 0
    %285 = vmatprep.subr.bf16.mxu0 0
    %286 = vmatpush1.bf16.msra.mxu0 0
    %287 = vmatprep.subr.bf16.mxu0 0
    %288 = vmatpush1.bf16.msra.mxu0 0
    %289 = vmatprep.subr.bf16.mxu0 0
    %290 = vmatpush1.bf16.msra.mxu0 0
    %291 = vmatprep.subr.bf16.mxu0 0
    %292 = vmatpush1.bf16.msra.mxu0 0
    %293 = vmatprep.subr.bf16.mxu0 0
    %294 = vmatpush1.bf16.msra.mxu0 0
    %295 = vmatprep.subr.bf16.mxu0 0
    %296 = vmatpush1.bf16.msra.mxu0 0
    %297 = vmatprep.mubr.bf16.mxu0 0
    %298 = vmatmul.mubr.bf16.gmra.mrb[0].mxu0 %v252
    %v299 = vpop.f32.mrb[0].mxu0
    %v300 = vadd.f32 0.0, %v299
    %v301 = vpop.f32.mrb[0].mxu0
    %v302 = vpop.f32.mrb[0].mxu0
    %v303 = vadd.f32 0.0, %v302
    %v304 = vpop.f32.mrb[0].mxu0
    %305 = vdwg.mxu0
    %v306 = vadd.f32 %v300, %v303
    %v307 = vrot.slane %v306, 4
    %v308 = vadd.f32 %v306, %v307
    %v309 = vrot.slane %v308, 2
    %v310 = vadd.f32 %v308, %v309
    %v311 = vrot.slane %v310, 1
    %v312 = vadd.f32 %v310, %v311
    %v313 = vmul.f32 %v312, 0.125
    %v314 = vsub.f32 %v300, %v313
    %v315 = vsub.f32 %v303, %v313
    %v316 = vmul.f32 %v314, %v314
    %v317 = vmul.f32 %v315, %v315
    %v318 = vmul.f32 %v316, %v88
    %v319 = vmul.f32 %v317, %v89
    %v320 = vadd.f32 %v318, %v319
    %v321 = vrot.slane %v320, 4
    %v322 = vadd.f32 %v320, %v321
    %v323 = vrot.slane %v322, 2
    %v324 = vadd.f32 %v322, %v323
    %v325 = vrot.slane %v324, 1
    %v326 = vadd.f32 %v324, %v325
    %v327 = vmul.f32 %v326, 0.125
    %v328 = vld [vmem:[%s3] sm:$0x1]
    %v329 = vadd.f32 %v327, 1e-05
    %v330 = vrsqrt.pop %v329
    %v331 = vmul.f32 %v328, %v330
    %v332 = vld [vmem:[%s4] sm:$0x1]
    %v333 = vmul.f32 %v313, %v331
    %v334 = vsub.f32 %v332, %v333
    %v336 = vlaneseq
    %v337 = vshrl.u32 %v336, 7
    %v338 = vsub.s32 0, %v337
    %v339 = vrot.slane %v331, %v338
    %v341 = vmul.f32 %v300, %v339
    %v342 = vmul.f32 %v303, %v339
    %v344 = vlaneseq
    %v345 = vshrl.u32 %v344, 7
    %v346 = vsub.s32 0, %v345
    %v347 = vrot.slane %v334, %v346
    %v349 = vadd.f32 %v341, %v347
    %v350 = vadd.f32 %v342, %v347
    %v351 = vmax.f32 %v349, 0.0
    %v352 = vmax.f32 %v350, 0.0
    %v353 = vmul.f32 %v351, %v88
    %v354 = vmul.f32 %v352, %v89
    %v355 = vpack.c.bf16 %v354, %v353
    %s356 = sshll.u32 %s254, 4
    %357 = dma.done %s69, %s356
    %v358 = vld [vmem:[#allocation3] sm:$0xff]
    %v359 = vld [vmem:[#allocation3 + $0x8] sm:$0xff]
    %v360 = vld [vmem:[#allocation3 + $0x10] sm:$0xff]
    %v361 = vld [vmem:[#allocation3 + $0x18] sm:$0xff]
    %v362 = vld [vmem:[#allocation3 + $0x20] sm:$0xff]
    %v363 = vld [vmem:[#allocation3 + $0x28] sm:$0xff]
    %v364 = vld [vmem:[#allocation3 + $0x30] sm:$0xff]
    %v365 = vld [vmem:[#allocation3 + $0x38] sm:$0xff]
    %v366 = vld [vmem:[%s5] sm:$0x1]
    %v368 = vlaneseq
    %v369 = vshrl.u32 %v368, 7
    %v370 = vsub.s32 0, %v369
    %v371 = vrot.slane %v366, %v370
    %373 = vmatprep.subr.bf16.mxu0 0
    %374 = vmatpush1.bf16.msra.mxu0 %v358
    %375 = vmatprep.subr.bf16.mxu0 0
    %376 = vmatpush1.bf16.msra.mxu0 %v359
    %377 = vmatprep.subr.bf16.mxu0 0
    %378 = vmatpush1.bf16.msra.mxu0 %v360
    %379 = vmatprep.subr.bf16.mxu0 0
    %380 = vmatpush1.bf16.msra.mxu0 %v361
    %381 = vmatprep.subr.bf16.mxu0 0
    %382 = vmatpush1.bf16.msra.mxu0 %v362
    %383 = vmatprep.subr.bf16.mxu0 0
    %384 = vmatpush1.bf16.msra.mxu0 %v363
    %385 = vmatprep.subr.bf16.mxu0 0
    %386 = vmatpush1.bf16.msra.mxu0 %v364
    %387 = vmatprep.subr.bf16.mxu0 0
    %388 = vmatpush1.bf16.msra.mxu0 %v365
    %389 = vmatprep.subr.bf16.mxu0 0
    %390 = vmatpush1.bf16.msra.mxu0 0
    %391 = vmatprep.subr.bf16.mxu0 0
    %392 = vmatpush1.bf16.msra.mxu0 0
    %393 = vmatprep.subr.bf16.mxu0 0
    %394 = vmatpush1.bf16.msra.mxu0 0
    %395 = vmatprep.subr.bf16.mxu0 0
    %396 = vmatpush1.bf16.msra.mxu0 0
    %397 = vmatprep.subr.bf16.mxu0 0
    %398 = vmatpush1.bf16.msra.mxu0 0
    %399 = vmatprep.subr.bf16.mxu0 0
    %400 = vmatpush1.bf16.msra.mxu0 0
    %401 = vmatprep.subr.bf16.mxu0 0
    %402 = vmatpush1.bf16.msra.mxu0 0
    %403 = vmatprep.subr.bf16.mxu0 0
    %404 = vmatpush1.bf16.msra.mxu0 0
    %405 = vmatprep.mubr.bf16.mxu0 0
    %406 = vmatmul.mubr.bf16.gmra.mrb[0].mxu0 %v355
    %v407 = vpop.f32.mrb[0].mxu0
    %v408 = vadd.f32 %v371, %v407
    %v409 = vpop.f32.mrb[0].mxu0
    %v410 = vpop.f32.mrb[0].mxu0
    %v411 = vadd.f32 %v371, %v410
    %v412 = vpop.f32.mrb[0].mxu0
    %413 = vdwg.mxu0
    %414 = vst [vmem:[#allocation10] sm:$0xff] %v408
    %415 = vst [vmem:[#allocation10 + $0x8] sm:$0xff] %v411
    // Predicated region
    $region46: #{tpu_custom_call.1} parent=1 // pred_check
      _
    $region47: #{tpu_custom_call.1} parent=1 // pred_check_branch
      %417 = sbr.rel (0) target = $region49
    $region48: #{tpu_custom_call.1} parent=1 // pred_region
      %s419 = ssub.s32 256, 256
      %420 = vsyncadd [#allocation7], %s419
      %s421 = sshll.u32 [#allocation10], 4
      %s422 = int_to_ptr.vmem [resolvable:$true] %s421
      %427 = dma.vmem_to_hbm [thread:$0]  %s422, 256, %s9, [#allocation7], 128, 128, 8
    $region49: #{tpu_custom_call.1} parent=1 // pred_fallthru
      _
    // Predicated region
    $region50: #{tpu_custom_call.1} parent=1 // pred_check
      _
    $region51: #{tpu_custom_call.1} parent=1 // pred_check_branch
      %429 = sbr.rel (0) target = $region53
    $region52: #{tpu_custom_call.1} parent=1 // pred_region
      %430 = dma.done [#allocation7], 256
    $region53: #{tpu_custom_call.1} parent=1 // pred_fallthru
      _
    %431 = vsyncpa [#allocation6], 1
    %432 = vsyncpa [#allocation9], 1
    %433 = vsyncpa [#allocation7], 1
  %434 = vsyncmov [#allocation4]
  %s435 = vpop.sfrf %434
  %p436 = scmp.eq.s32.totalorder %s435, 0
  %p437 = pneg %p436
  %439 = shalt.err (%p437)
  %s440 = scalar_lea.sflag [#allocation4], 1
  %441 = vsyncmov %s440
  %s442 = vpop.sfrf %441
  %p443 = scmp.eq.s32.totalorder %s442, 0
  %p444 = pneg %p443
  %446 = shalt.err (%p444)

</llo_original>
